<compile_context>
chip_gen: v6e
topology: v6e:2x2x1
jax: 0.10.0
libtpu: 0.0.40
codegen_flags: <defaults>
</compile_context>

<pallas_src>
import jax
import jax.numpy as jnp
from jax.experimental import pallas as pl
from jax.experimental.pallas import tpu as pltpu

_LANES = 128
_MIB = 1024 * 1024


def _make_ls_ce_kernel(epsilon, n_total, tile_n, tiles_per_part):
    eps = float(epsilon)

    def kernel(pred_ref, tgt_ref, out_ref, acc_ref):
        p = pl.program_id(0)   # batch-part axis ("parallel")
        i = pl.program_id(1)   # tile-within-part axis ("arbitrary" reduction)

        @pl.when(i == 0)
        def _init():
            acc_ref[...] = jnp.zeros_like(acc_ref)

        x = pred_ref[...].astype(jnp.float32)            # (tile_n, C)
        tgt = tgt_ref[...]                               # (tile_n, 1) int32
        tn, c = x.shape

        # log-softmax pieces along the class (lane) axis
        m = jnp.max(x, axis=1, keepdims=True)            # (tile_n, 1)
        shifted = x - m
        lse = jnp.log(jnp.sum(jnp.exp(shifted), axis=1, keepdims=True))

        # Fused weighted reduction (single cross-lane sum):
        #   loss = -sum(smoothed * (shifted - lse)) = lse - sum(w * shifted)
        #   w = (1-eps)*onehot + eps/C,  sum(w) == 1
        classes = jax.lax.broadcasted_iota(jnp.int32, (tn, c), 1)
        w = jnp.where(classes == tgt, 1.0 - eps + eps / c, eps / c)
        loss = lse - jnp.sum(w * shifted, axis=1, keepdims=True)  # (tile_n, 1)

        # mask padded / out-of-range rows (partial edge block, clamped dummy
        # blocks) BEFORE the per-tile sum
        row = jax.lax.broadcasted_iota(jnp.int32, (tn, 1), 0)
        global_row = (p * tiles_per_part + i) * tile_n + row
        loss = jnp.where(global_row < n_total, loss, 0.0)

        acc_ref[...] += jnp.sum(loss)                    # scalar broadcast add

        @pl.when(i == pl.num_programs(1) - 1)
        def _finalize():
            out_ref[...] = acc_ref[...]

    return kernel


def _tpu_vmem_capacity_bytes():
    try:
        return int(pltpu.get_tpu_info().vmem_capacity_bytes)
    except Exception:
        pass
    try:
        if "v7" in jax.devices()[0].device_kind.lower():
            return 64 * _MIB
    except Exception:
        pass
    return 128 * _MIB


def _default_num_parts():
    # 2 TensorCores only on v7x-class chips; v5e / v6e are single-TC.
    try:
        kind = jax.devices()[0].device_kind.lower()
    except Exception:
        return 1
    return 2 if "v7" in kind else 1


def _xla_fallback(pred, target, epsilon, reduction):
    n, c = pred.shape
    logp = jax.nn.log_softmax(pred.astype(jnp.float32), axis=1)
    nll = -jnp.take_along_axis(logp, target.astype(jnp.int32)[:, None], axis=1)[:, 0]
    loss = (1.0 - epsilon) * nll - (epsilon / c) * jnp.sum(logp, axis=1)
    return jnp.mean(loss) if reduction == "mean" else jnp.sum(loss)


def label_smoothing_cross_entropy(pred, target, epsilon=0.1, reduction="mean",
                                  num_parts=None):
    """Pallas TPU implementation of LabelSmoothingCrossEntropy.forward.

    pred:   (N, C) float logits (f32 or bf16 — streamed in its own dtype)
    target: (N,)   integer class indices
    """
    if reduction not in ("mean", "sum"):
        # TODO(synk): reduction='none' (per-row loss output) not implemented in the Pallas path.
        raise NotImplementedError("reduction='none' not implemented")
    # TODO(synk): target values outside [0, C) are not excluded (no ignore_index),
    # matching the reference module's scatter-based semantics only for valid targets.

    n, c = pred.shape
    itemsize = jnp.dtype(pred.dtype).itemsize

    if num_parts is None:
        num_parts = _default_num_parts()
    if n < 8:
        num_parts = 1          # keep the (tile_n, 1) target block a full-dim block

    # --- generation-aware VMEM budgets ---------------------------------------
    vmem_cap = _tpu_vmem_capacity_bytes()
    if vmem_cap <= 64 * _MIB:                      # v7x-class: 64 MiB / TC
        tile_budget, vmem_cap_limit = 24 * _MIB, 48 * _MIB
    else:                                          # v5e / v6e: 128 MiB
        tile_budget, vmem_cap_limit = 48 * _MIB, 100 * _MIB

    # per-row VMEM cost: double-buffered logits + f32 temporaries (x/shifted/
    # exp/w, compiler reuses some) + the (tile_n, 1) int32 target block which is
    # lane-padded to 128 lanes and double-buffered (2 * 128 * 4 B per row).
    per_row = c * (2 * itemsize + 16) + 2 * _LANES * 4

    if (tile_budget // per_row) < 8:
        # TODO(synk): class-axis-tiled online-logsumexp kernel for rows that do
        # not fit VMEM; fall back to plain XLA instead of failing to compile.
        return _xla_fallback(pred, target, epsilon, reduction)

    # --- tile size -------------------------------------------------------------
    tile_from_budget = max(8, min(1024, ((tile_budget // per_row) // 8) * 8))
    if n >= 8:
        rows_per_part = max(8, (int(pl.cdiv(n, num_parts)) // 8) * 8)
        tile_n = int(min(tile_from_budget, rows_per_part))
    else:
        tile_n = n                                  # full-dim block for tiny N

    total_tiles = int(pl.cdiv(n, tile_n))
    tiles_per_part = int(pl.cdiv(total_tiles, num_parts))
    last_block = total_tiles - 1

    # pred streamed UNPADDED (partial edge block masked in-kernel); only the
    # tiny (N, 1) target is padded so its blocks always exist.
    n_pad = num_parts * tiles_per_part * tile_n
    tgt2d = target.astype(jnp.int32).reshape(n, 1)
    tgt_p = tgt2d if n_pad == n else jnp.pad(tgt2d, ((0, n_pad - n), (0, 0)))

    kernel = _make_ls_ce_kernel(epsilon, n, tile_n, tiles_per_part)

    # Deeper pipelining of the logit stream only when huge C squeezed the tile
    # (amortizes the ~0.35 us per-grid-step overhead). Never triggers for small C.
    deep_buffer = (tile_budget // per_row) < 64

    working_set = tile_n * per_row + 4 * _MIB
    if deep_buffer:
        working_set += tile_n * c * itemsize        # third logit buffer
    vmem_limit = int(min(vmem_cap_limit, max(32 * _MIB, working_set)))

    pred_kwargs = {"pipeline_mode": pl.Buffered(3)} if deep_buffer else {}
    pred_spec = pl.BlockSpec(
        (tile_n, c),
        # clamp fully-out-of-range block indices (uneven part split); the
        # duplicated reads are zeroed by the global_row mask in the kernel.
        lambda p_, i_: (jnp.minimum(p_ * tiles_per_part + i_, last_block), 0),
        **pred_kwargs)
    tgt_spec = pl.BlockSpec((tile_n, 1),
                            lambda p_, i_: (p_ * tiles_per_part + i_, 0))

    partials = pl.pallas_call(
        kernel,
        out_shape=jax.ShapeDtypeStruct((1, num_parts * _LANES), jnp.float32),
        grid=(num_parts, tiles_per_part),
        in_specs=[pred_spec, tgt_spec],
        out_specs=pl.BlockSpec((1, _LANES), lambda p_, i_: (0, p_)),
        scratch_shapes=[pltpu.VMEM((1, _LANES), jnp.float32)],
        compiler_params=pltpu.CompilerParams(
            dimension_semantics=("parallel", "arbitrary"),
            vmem_limit_bytes=vmem_limit,
        ),
    )(pred, tgt_p)

    total = jnp.sum(partials[0, ::_LANES])   # lane-0 partial of each part
    if reduction == "mean":
        return total / n
    return total


def _reference(pred, target, epsilon=0.1):
    # pure-JAX reference (mirrors the PyTorch module) for sanity checking
    n, c = pred.shape
    one_hot = jax.nn.one_hot(target, c, dtype=jnp.float32)
    smoothed = (1.0 - epsilon) * one_hot + epsilon / c
    log_pred = jax.nn.log_softmax(pred.astype(jnp.float32), axis=1)
    loss = -jnp.sum(smoothed * log_pred, axis=1)
    return jnp.mean(loss)


if __name__ == "__main__":
    key = jax.random.PRNGKey(0)
    k1, k2, k3, k4 = jax.random.split(key, 4)

    # case 1: divisible batch (batch=8, num_classes=32)
    N1, C1 = 8, 32
    pred1 = jax.random.normal(k1, (N1, C1), dtype=jnp.float32)
    tgt1 = jax.random.randint(k2, (N1,), 0, C1, dtype=jnp.int32)
    out1 = jax.block_until_ready(
        label_smoothing_cross_entropy(pred1, tgt1, epsilon=0.1))
    ref1 = _reference(pred1, tgt1, epsilon=0.1)
    assert jnp.allclose(out1, ref1, atol=1e-5, rtol=1e-5), (out1, ref1)

    # case 2: non-divisible batch — exercises the pad-free partial edge block
    N2, C2 = 13, 32
    pred2 = jax.random.normal(k3, (N2, C2), dtype=jnp.float32)
    tgt2 = jax.random.randint(k4, (N2,), 0, C2, dtype=jnp.int32)
    out2 = jax.block_until_ready(
        label_smoothing_cross_entropy(pred2, tgt2, epsilon=0.1))
    ref2 = _reference(pred2, tgt2, epsilon=0.1)
    assert jnp.allclose(out2, ref2, atol=1e-5, rtol=1e-5), (out2, ref2)

    print("KERNEL_OK")
</pallas_src>

<mosaic_0001>
module attributes {stable_mosaic.version = 11 : i64} {
  func.func @kernel(%arg0: i32, %arg1: i32, %arg2: memref<8x32xf32, #tpu.memory_space<vmem>>, %arg3: memref<8x1xi32, #tpu.memory_space<vmem>>, %arg4: memref<1x128xf32, #tpu.memory_space<vmem>>, %arg5: memref<1x128xf32, #tpu.memory_space<vmem>>) attributes {dimension_semantics = [#tpu.dimension_semantics<parallel>, #tpu.dimension_semantics<arbitrary>], iteration_bounds = array<i64: 1, 1>, scalar_prefetch = 0 : i64, scratch_operands = 1 : i64, tpu.core_type = #tpu.core_type<tc>, window_params = [{transform_indices = @transform_0, window_bounds = array<i64: 8, 32>}, {transform_indices = @transform_1, window_bounds = array<i64: 8, 1>}, {transform_indices = @transform_2, window_bounds = array<i64: 1, 128>}]} {
    %c0_i32 = arith.constant 0 : i32
    %0 = arith.cmpi eq, %arg1, %c0_i32 : i32
    %1 = arith.extui %0 : i1 to i32
    %c0_i32_0 = arith.constant 0 : i32
    %2 = arith.cmpi ne, %1, %c0_i32_0 : i32
    scf.if %2 {
      %cst_17 = arith.constant 0.000000e+00 : f32
      %44 = vector.broadcast %cst_17 : f32 to vector<1x128xf32>
      %c0_18 = arith.constant 0 : index
      %c0_19 = arith.constant 0 : index
      %45 = vector.load %arg5[%c0_18, %c0_19] : memref<1x128xf32, #tpu.memory_space<vmem>>, vector<1x128xf32>
      tpu.vector_store %arg5[%c0_18, %c0_19], %44 {strides = array<i32>} : memref<1x128xf32, #tpu.memory_space<vmem>>, vector<1x128xf32>,
    } else {
    }
    %c0 = arith.constant 0 : index
    %c0_1 = arith.constant 0 : index
    %3 = vector.load %arg2[%c0, %c0_1] : memref<8x32xf32, #tpu.memory_space<vmem>>, vector<8x32xf32>
    %c0_2 = arith.constant 0 : index
    %c0_3 = arith.constant 0 : index
    %4 = vector.load %arg3[%c0_2, %c0_3] : memref<8x1xi32, #tpu.memory_space<vmem>>, vector<8x1xi32>
    %cst = arith.constant dense<0xFF800000> : vector<8xf32>
    %5 = vector.multi_reduction <maximumf>, %3, %cst [1] : vector<8x32xf32> to vector<8xf32>
    %6 = vector.shape_cast %5 : vector<8xf32> to vector<8x1xf32>
    %7 = vector.broadcast %6 : vector<8x1xf32> to vector<8x32xf32>
    %8 = arith.subf %3, %7 : vector<8x32xf32>
    %9 = math.exp %8 : vector<8x32xf32>
    %cst_4 = arith.constant dense<0.000000e+00> : vector<8xf32>
    %10 = vector.multi_reduction <add>, %9, %cst_4 [1] : vector<8x32xf32> to vector<8xf32>
    %11 = vector.shape_cast %10 : vector<8xf32> to vector<8x1xf32>
    %12 = math.log %11 : vector<8x1xf32>
    %13 = tpu.iota {dimensions = array<i32: 1>} : vector<8x32xi32>
    %14 = vector.broadcast %4 : vector<8x1xi32> to vector<8x32xi32>
    %15 = arith.cmpi eq, %13, %14 : vector<8x32xi32>
    %cst_5 = arith.constant 0.903124988 : f32
    %cst_6 = arith.constant 3.125000e-03 : f32
    %16 = vector.broadcast %cst_5 : f32 to vector<8x32xf32>
    %17 = vector.broadcast %cst_6 : f32 to vector<8x32xf32>
    %18 = arith.select %15, %16, %17 : vector<8x32xi1>, vector<8x32xf32>
    %19 = arith.mulf %18, %8 : vector<8x32xf32>
    %cst_7 = arith.constant dense<0.000000e+00> : vector<8xf32>
    %20 = vector.multi_reduction <add>, %19, %cst_7 [1] : vector<8x32xf32> to vector<8xf32>
    %21 = vector.shape_cast %20 : vector<8xf32> to vector<8x1xf32>
    %22 = arith.subf %12, %21 : vector<8x1xf32>
    %23 = tpu.iota {dimensions = array<i32: 0>} : vector<8x1xi32>
    %c1_i32 = arith.constant 1 : i32
    %24 = arith.muli %arg0, %c1_i32 : i32
    %25 = arith.addi %24, %arg1 : i32
    %c8_i32 = arith.constant 8 : i32
    %26 = arith.muli %25, %c8_i32 : i32
    %27 = vector.broadcast %26 : i32 to vector<8x1xi32>
    %28 = arith.addi %27, %23 : vector<8x1xi32>
    %c8_i32_8 = arith.constant 8 : i32
    %29 = vector.broadcast %c8_i32_8 : i32 to vector<8x1xi32>
    %30 = arith.cmpi slt, %28, %29 : vector<8x1xi32>
    %cst_9 = arith.constant 0.000000e+00 : f32
    %31 = vector.broadcast %cst_9 : f32 to vector<8x1xf32>
    %32 = arith.select %30, %22, %31 : vector<8x1xi1>, vector<8x1xf32>
    %c0_10 = arith.constant 0 : index
    %c0_11 = arith.constant 0 : index
    %33 = vector.load %arg5[%c0_10, %c0_11] : memref<1x128xf32, #tpu.memory_space<vmem>>, vector<1x128xf32>
    %34 = vector.shape_cast %32 : vector<8x1xf32> to vector<1x8x1xf32>
    %cst_12 = arith.constant dense<0.000000e+00> : vector<1xf32>
    %35 = vector.multi_reduction <add>, %34, %cst_12 [1, 2] : vector<1x8x1xf32> to vector<1xf32>
    %36 = vector.shape_cast %35 : vector<1xf32> to vector<1x1x1xf32>
    %37 = vector.extract %36[0, 0, 0] : f32 from vector<1x1x1xf32>
    %38 = vector.broadcast %37 : f32 to vector<1x128xf32>
    %39 = arith.addf %33, %38 : vector<1x128xf32>
    %c0_13 = arith.constant 0 : index
    %c0_14 = arith.constant 0 : index
    %40 = vector.load %arg5[%c0_13, %c0_14] : memref<1x128xf32, #tpu.memory_space<vmem>>, vector<1x128xf32>
    tpu.vector_store %arg5[%c0_13, %c0_14], %39 {strides = array<i32>} : memref<1x128xf32, #tpu.memory_space<vmem>>, vector<1x128xf32>,
    %c0_i32_15 = arith.constant 0 : i32
    %41 = arith.cmpi eq, %arg1, %c0_i32_15 : i32
    %42 = arith.extui %41 : i1 to i32
    %c0_i32_16 = arith.constant 0 : i32
    %43 = arith.cmpi ne, %42, %c0_i32_16 : i32
    scf.if %43 {
      %c0_17 = arith.constant 0 : index
      %c0_18 = arith.constant 0 : index
      %44 = vector.load %arg5[%c0_17, %c0_18] : memref<1x128xf32, #tpu.memory_space<vmem>>, vector<1x128xf32>
      %c0_19 = arith.constant 0 : index
      %c0_20 = arith.constant 0 : index
      %45 = vector.load %arg4[%c0_19, %c0_20] : memref<1x128xf32, #tpu.memory_space<vmem>>, vector<1x128xf32>
      tpu.vector_store %arg4[%c0_19, %c0_20], %44 {strides = array<i32>} : memref<1x128xf32, #tpu.memory_space<vmem>>, vector<1x128xf32>,
    } else {
    }
    return
  }
  func.func @transform_0(%arg0: i32, %arg1: i32) -> (i32, i32) {
    %c1_i32 = arith.constant 1 : i32
    %0 = arith.muli %arg0, %c1_i32 : i32
    %1 = arith.addi %0, %arg1 : i32
    %c0_i32 = arith.constant 0 : i32
    %2 = arith.minsi %1, %c0_i32 : i32
    %c0_i32_0 = arith.constant 0 : i32
    %c0_i32_1 = arith.constant 0 : i32
    return %2, %c0_i32_0 : i32, i32
  }
  func.func @transform_1(%arg0: i32, %arg1: i32) -> (i32, i32) {
    %c1_i32 = arith.constant 1 : i32
    %0 = arith.muli %arg0, %c1_i32 : i32
    %1 = arith.addi %0, %arg1 : i32
    %c0_i32 = arith.constant 0 : i32
    %c0_i32_0 = arith.constant 0 : i32
    return %1, %c0_i32 : i32, i32
  }
  func.func @transform_2(%arg0: i32, %arg1: i32) -> (i32, i32) {
    %c0_i32 = arith.constant 0 : i32
    %c0_i32_0 = arith.constant 0 : i32
    return %c0_i32, %arg0 : i32, i32
  }
}

</mosaic_0001>

<llo_original>
// kernel: tpu_custom_call.1
$region0: #{tpu_custom_call.1}
  #allocation0 [shape = 'u32[]', space=smem, size = 0x4, offset = 0x4, fixed_abs, tag = 'smem constant byte address 0x4 - core index']
  #allocation1 [shape = 'u32[144,128]{1,0:T(1,128)}', space=vmem, size = 0x12000, scoped, tag = 'internal scratch']
  #allocation2 [shape = 'f32[1,128]{1,0:T(1,128)}', space=vmem, size = 0x200, scoped, tag = 'scratch operand']
  %s0 = inlined_call_operand.vmem [shape: f32[8,32], index: 0, kind: input, shape index: {}]
  %s1 = inlined_call_operand.vmem [shape: s32[8,1], index: 1, kind: input, shape index: {}]
  %s2 = inlined_call_operand.hbm [shape: f32[1,128], index: 2, kind: output, shape index: {}]
  %s3 = sld [smem:[#allocation0]]
  $region26: #{tpu_custom_call.1} parent=0
    _
  %s5 = ssub.s32 1, %s3
  %s6 = scalar_select 0, %s5, %s3
  $region1: #{tpu_custom_call.1} parent=0
    #allocation3 [shape = 'u8[512]{0}', space=vmem, size = 0x400, scoped, tag = 'output window, operand 0, single buffered']
    #allocation4 [shape = 's32[1]{0}', space=sflag, size = 0x4, scoped, tag = 'scoped memory for tpu_custom_call.1']
    %7 = vsyncpa [#allocation4], 0
    // Predicated region
    $region2: #{tpu_custom_call.1} parent=1 // pred_check
      _
    $region3: #{tpu_custom_call.1} parent=1 // pred_check_branch
      %9 = sbr.rel (0) target = $region5
    $region4: #{tpu_custom_call.1} parent=1 // pred_region
      %s10 = sadd.s32 0, 0
      %p11 = scmp.lt.s32.totalorder %s10, 0
      %s12 = scalar_select %p11, %s10, 0
      %p13 = scmp.lt.s32.totalorder %s12, 0
      %s14 = scalar_select %p13, %s12, 0
      %s15 = smul.addr %s14, 8
      %s16 = scalar_lea.vmem %s0, %s15
      %s17 = sadd.s32 0, 0
      %p18 = scmp.lt.s32.totalorder %s17, 0
      %s19 = scalar_select %p18, %s17, 0
    $region5: #{tpu_custom_call.1} parent=1 // pred_fallthru
      _
    // Predicated region
    $region6: #{tpu_custom_call.1} parent=1 // pred_check
      _
    $region7: #{tpu_custom_call.1} parent=1 // pred_check_branch
      %21 = sbr.rel (0) target = $region9
    $region8: #{tpu_custom_call.1} parent=1 // pred_region
      %s22 = sadd.s32 0, 0
      %p23 = scmp.lt.s32.totalorder %s22, 0
      %s24 = scalar_select %p23, %s22, 0
      %s25 = smul.addr %s24, 8
      %s26 = scalar_lea.vmem %s1, %s25
      %s27 = sadd.s32 0, 0
    $region9: #{tpu_custom_call.1} parent=1 // pred_fallthru
      _
    %s28 = sadd.s32 0, 0
    %p29 = scmp.lt.s32.totalorder %s28, 0
    %s30 = scalar_select %p29, %s28, 0
    %p31 = scmp.lt.s32.totalorder %s30, 0
    %s32 = scalar_select %p31, %s30, 0
    %s33 = smul.addr %s32, 8
    %s34 = scalar_lea.vmem %s0, %s33
    %s35 = sadd.s32 0, 0
    %p36 = scmp.lt.s32.totalorder %s35, 0
    %s37 = scalar_select %p36, %s35, 0
    %s38 = smul.addr %s37, 8
    %s39 = scalar_lea.vmem %s1, %s38
    %s40 = sadd.s32 0, 0
    %p41 = scmp.lt.s32.totalorder %s40, 0
    %s42 = scalar_select %p41, %s40, 0
    %p43 = scmp.lt.s32.totalorder %s42, 0
    %s44 = scalar_select %p43, %s42, 0
    %s45 = smul.addr %s44, 8
    %s46 = scalar_lea.vmem %s0, %s45
    %s47 = sadd.s32 0, 0
    %p48 = scmp.lt.s32.totalorder %s47, 0
    %s49 = scalar_select %p48, %s47, 0
    %s50 = sadd.s32 0, 0
    %p51 = scmp.lt.s32.totalorder %s50, 0
    %s52 = scalar_select %p51, %s50, 0
    %s53 = smul.addr %s52, 8
    %s54 = scalar_lea.vmem %s1, %s53
    %s55 = sadd.s32 0, 0
    %p56 = scmp.eq.s32.totalorder 0, 0
    // Predicated region
    $region10: #{tpu_custom_call.1} parent=1 // pred_check
      %p57 = pneg %p56
    $region11: #{tpu_custom_call.1} parent=1 // pred_check_branch
      %59 = sbr.rel (%p57) target = $region13
    $region12: #{tpu_custom_call.1} parent=1 // pred_region
      %60 = vst [vmem:[#allocation2] sm:$0x1] 0.0
    $region13: #{tpu_custom_call.1} parent=1 // pred_fallthru
      _
    %v61 = vld [vmem:[%s46] sm:$0xff]
    %v62 = vld [vmem:[%s54] sm:$0xff]
    %vm63 = vcmask 261120
    %v64 = vsel %vm63, %v61, -inf
    %65 = vmax.xlane.f32.xlu0 %v64
    %v66 = vpop.xlane.xlu0 %65
    %v67 = vsub.f32 %v61, %v66
    %v68 = vmul.f32 %v67, 1.442695
    %v69 = vpow.pop %v68
    %v70 = vsel %vm63, %v69, 0.0
    %71 = vadd.xlane.f32.xlu0 %v70
    %v72 = vpop.xlane.xlu0 %71
    %v73 = vlog2.pop %v72
    %v74 = vmul.f32 %v73, 0.6931472
    %v75 = vlaneseq
    %v76 = vand.u32 %v75, 127
    %77 = vset.pattern.permute.xlu0 0
    %78 = vperm.xlu0 %77, %v62
    %v79 = vpop.permute.xlu0 %78
    %vm80 = vcmp.eq.s32.totalorder %v76, %v79
    %v81 = vsel %vm80, 0.903125, 0.003125
    %v82 = vmul.f32 %v81, %v67
    %v83 = vsel %vm63, %v82, 0.0
    %84 = vadd.xlane.f32.xlu0 %v83
    %v85 = vpop.xlane.xlu0 %84
    %v86 = vsub.f32 %v74, %v85
    %v87 = vlaneseq
    %v88 = vshrl.u32 %v87, 7
    %s89 = sadd.s32 0, 0
    %s90 = smul.u32 %s89, 8
    %v91 = vstv %s90
    %v92 = vadd.s32 %v91, %v88
    %vm93 = vcmp.lt.s32.totalorder %v92, 8
    %v94 = vsel %vm93, %v86, 0.0
    %v95 = vld [vmem:[#allocation2] sm:$0x1]
    %vm96 = vcmask 7168
    %v97 = vsel %vm96, %v94, 0.0
    %98 = vadd.xlane.f32.xlu0 %v97
    %v99 = vpop.xlane.xlu0 %98
    %v100 = vrot.slane %v99, 4
    %v101 = vadd.f32 %v99, %v100
    %v102 = vrot.slane %v101, 2
    %v103 = vadd.f32 %v101, %v102
    %v104 = vrot.slane %v103, 1
    %v105 = vadd.f32 %v103, %v104
    %s106 = vtos %v105
    %v107 = vstv %s106
    %v108 = vadd.f32 %v95, %v107
    %109 = vst [vmem:[#allocation2] sm:$0x1] %v108
    // Predicated region
    $region14: #{tpu_custom_call.1} parent=1 // pred_check
      %p110 = pneg %p56
    $region15: #{tpu_custom_call.1} parent=1 // pred_check_branch
      %112 = sbr.rel (%p110) target = $region17
    $region16: #{tpu_custom_call.1} parent=1 // pred_region
      %v113 = vld [vmem:[#allocation2] sm:$0x1]
      %114 = vst [vmem:[#allocation3] sm:$0x1] %v113
    $region17: #{tpu_custom_call.1} parent=1 // pred_fallthru
      _
    // Predicated region
    $region18: #{tpu_custom_call.1} parent=1 // pred_check
      _
    $region19: #{tpu_custom_call.1} parent=1 // pred_check_branch
      %116 = sbr.rel (0) target = $region21
    $region20: #{tpu_custom_call.1} parent=1 // pred_region
      %s118 = ssub.s32 16, 16
      %119 = vsyncadd [#allocation4], %s118
      %s121 = sshll.u32 [#allocation3], 4
      %s122 = int_to_ptr.vmem [resolvable:$true] %s121
      %124 = dma.vmem_to_hbm [thread:$0]  %s122, 16, %s2, [#allocation4]
    $region21: #{tpu_custom_call.1} parent=1 // pred_fallthru
      _
    // Predicated region
    $region22: #{tpu_custom_call.1} parent=1 // pred_check
      _
    $region23: #{tpu_custom_call.1} parent=1 // pred_check_branch
      %126 = sbr.rel (0) target = $region25
    $region24: #{tpu_custom_call.1} parent=1 // pred_region
      %127 = dma.done [#allocation4], 16
    $region25: #{tpu_custom_call.1} parent=1 // pred_fallthru
      _
    %128 = vsyncpa [#allocation4], 1

</llo_original>
